<compile_context>
chip_gen: v5e
topology: v5e:2x2
jax: 0.10.0
libtpu: 0.0.40
codegen_flags: <defaults>
</compile_context>

<pallas_src>
import functools

import jax
import jax.numpy as jnp
from jax.experimental import pallas as pl
from jax.experimental.pallas import tpu as pltpu

LANE = 128


def _round_up(x, m):
    return (x + m - 1) // m * m


# ----------------------------- Pallas kernel ------------------------------- #

def fused_embed_kernel(p_ref, wc_ref, bc_ref, wf_ref, bf_ref, o_ref,
                       *, imgs_per_tile, hw):
    # p : (imgs_per_tile * hw, kdim)  im2col patches for this tile of images
    # wc: (kdim, COUT_PAD)            conv weight, zero-padded to 128 lanes
    # bc: (1, COUT_PAD)               conv bias   (padded)
    # wf: (COUT_PAD, F_PAD)           fc weight   (padded)
    # bf: (1, F_PAD)                  fc bias     (padded)
    # o : (1, imgs_per_tile, F_PAD)   lane-dense output block
    conv = jnp.dot(p_ref[...], wc_ref[...], preferred_element_type=jnp.float32)
    conv = jnp.maximum(conv + bc_ref[...], 0.0)                  # bias + ReLU
    cpad = conv.shape[-1]
    # Global average pool per image: sublane reduction, scale by constant.
    pooled = conv.reshape(imgs_per_tile, hw, cpad).sum(axis=1) * (1.0 / hw)
    out = jnp.dot(pooled, wf_ref[...], preferred_element_type=jnp.float32)
    o_ref[0] = out + bf_ref[...]


# ------------------------------ JAX glue ----------------------------------- #

def _im2col_nhwc(x_nhwc, k=3, pad=1):
    """(B,H,W,C) -> (B*H*W, k*k*C), patch order (di, dj, c)."""
    B, H, W, C = x_nhwc.shape
    xp = jnp.pad(x_nhwc, ((0, 0), (pad, pad), (pad, pad), (0, 0)))
    cols = []
    for di in range(k):
        for dj in range(k):
            cols.append(xp[:, di:di + H, dj:dj + W, :])
    patches = jnp.stack(cols, axis=3)                 # (B, H, W, k*k, C)
    return patches.reshape(B * H * W, k * k * C)


def init_params(key, c_in=4, c_out=8, k=3, feature_dim=32):
    k1, k2, k3, k4 = jax.random.split(key, 4)
    # PyTorch-shaped parameters (deterministic synthetic init).
    w_conv = jax.random.normal(k1, (c_out, c_in, k, k), jnp.float32) * 0.1
    b_conv = jax.random.normal(k2, (c_out,), jnp.float32) * 0.1
    w_fc = jax.random.normal(k3, (feature_dim, c_out), jnp.float32) * 0.1
    b_fc = jax.random.normal(k4, (feature_dim,), jnp.float32) * 0.1
    return {"w_conv": w_conv, "b_conv": b_conv, "w_fc": w_fc, "b_fc": b_fc}


def _choose_imgs_per_tile(n_imgs, hw, max_rows=2048):
    """Largest images-per-tile keeping tiles <= max_rows rows while (when
    possible) leaving >= 2 grid steps so v7x's two TensorCores both get work."""
    best = 1
    for d in range(1, n_imgs + 1):
        if n_imgs % d != 0 or d * hw > max_rows:
            continue
        if n_imgs >= 2 and n_imgs // d < 2:
            continue
        best = d
    return best


def embed(x_nchw, params, k=3, pad=1):
    """Embedding net forward: NCHW batch -> (B, feature_dim). One pallas_call."""
    B, C, H, W = x_nchw.shape
    c_out = params["w_conv"].shape[0]
    feat_dim = params["w_fc"].shape[0]
    hw = H * W
    kdim = k * k * C
    cout_pad = _round_up(c_out, LANE)
    f_pad = _round_up(feat_dim, LANE)

    # im2col in XLA (cheap at this image size); patch order (di, dj, c).
    # TODO(synk): for large H,W form the k*k shifted slices inside the kernel
    # instead of materializing the im2col matrix in HBM.
    x_nhwc = jnp.transpose(x_nchw, (0, 2, 3, 1))
    patches = _im2col_nhwc(x_nhwc, k=k, pad=pad)          # (B*H*W, kdim)

    # Conv weight (Cout, Cin, k, k) -> (k, k, Cin, Cout) -> (kdim, Cout),
    # zero-padded to 128 output lanes so the kernel's stores are lane-dense.
    wc = jnp.transpose(params["w_conv"], (2, 3, 1, 0)).reshape(kdim, c_out)
    wc_pad = jnp.zeros((kdim, cout_pad), jnp.float32).at[:, :c_out].set(wc)
    bc_pad = jnp.zeros((1, cout_pad), jnp.float32).at[0, :c_out].set(
        params["b_conv"])
    wf_pad = jnp.zeros((cout_pad, f_pad), jnp.float32).at[:c_out, :feat_dim].set(
        params["w_fc"].T)
    bf_pad = jnp.zeros((1, f_pad), jnp.float32).at[0, :feat_dim].set(
        params["b_fc"])

    imgs_per_tile = _choose_imgs_per_tile(B, hw)
    num_tiles = B // imgs_per_tile
    tile_rows = imgs_per_tile * hw

    kernel = functools.partial(
        fused_embed_kernel, imgs_per_tile=imgs_per_tile, hw=hw)

    out = pl.pallas_call(
        kernel,
        out_shape=jax.ShapeDtypeStruct((num_tiles, imgs_per_tile, f_pad),
                                       jnp.float32),
        grid=(num_tiles,),
        in_specs=[
            pl.BlockSpec((tile_rows, kdim), lambda i: (i, 0)),   # patch tile
            pl.BlockSpec((kdim, cout_pad), lambda i: (0, 0)),    # conv W (resident)
            pl.BlockSpec((1, cout_pad), lambda i: (0, 0)),       # conv b
            pl.BlockSpec((cout_pad, f_pad), lambda i: (0, 0)),   # fc W
            pl.BlockSpec((1, f_pad), lambda i: (0, 0)),          # fc b
        ],
        out_specs=pl.BlockSpec((1, imgs_per_tile, f_pad), lambda i: (i, 0, 0)),
        compiler_params=pltpu.CompilerParams(
            dimension_semantics=("parallel",),
            vmem_limit_bytes=32 * 1024 * 1024,
        ),
    )(patches, wc_pad, bc_pad, wf_pad, bf_pad)

    return out.reshape(B, f_pad)[:, :feat_dim]


def siamese_forward(x, params):
    """x = (x1, x2), each NCHW. Shared weights; both branches are batched into
    a single fused pallas_call and the result is split afterwards."""
    x1, x2 = x
    b = x1.shape[0]
    emb = embed(jnp.concatenate([x1, x2], axis=0), params)
    return emb[:b], emb[b:]


def get_embedding(x, params):
    return embed(x, params)


# Pure-JAX reference (independent lax.conv path) for a correctness check.
def _embed_reference(x_nchw, params):
    conv = jax.lax.conv_general_dilated(
        x_nchw, params["w_conv"], window_strides=(1, 1), padding="SAME",
        dimension_numbers=("NCHW", "OIHW", "NCHW"))
    conv = jax.nn.relu(conv + params["b_conv"][None, :, None, None])
    pooled = conv.mean(axis=(2, 3))
    return pooled @ params["w_fc"].T + params["b_fc"]


# --------------------------------- main ------------------------------------ #

if __name__ == "__main__":
    key = jax.random.PRNGKey(0)
    kx1, kx2, kp = jax.random.split(key, 3)

    B, C, H, W = 2, 4, 16, 16
    x1 = jax.random.normal(kx1, (B, C, H, W), jnp.float32)
    x2 = jax.random.normal(kx2, (B, C, H, W), jnp.float32)
    params = init_params(kp, c_in=C, c_out=8, k=3, feature_dim=32)

    fwd = jax.jit(lambda a, b, p: siamese_forward((a, b), p))
    out1, out2 = fwd(x1, x2, params)
    jax.block_until_ready((out1, out2))

    assert out1.shape == (B, 32) and out2.shape == (B, 32)

    ref1 = _embed_reference(x1, params)
    ref2 = _embed_reference(x2, params)
    assert jnp.allclose(out1, ref1, atol=2e-4, rtol=2e-4), float(
        jnp.max(jnp.abs(out1 - ref1)))
    assert jnp.allclose(out2, ref2, atol=2e-4, rtol=2e-4), float(
        jnp.max(jnp.abs(out2 - ref2)))

    print("KERNEL_OK")
</pallas_src>

<mosaic_0001>
module attributes {stable_mosaic.version = 11 : i64} {
  func.func @fused_embed_kernel(%arg0: i32, %arg1: memref<512x36xf32, #tpu.memory_space<vmem>>, %arg2: memref<36x128xf32, #tpu.memory_space<vmem>>, %arg3: memref<1x128xf32, #tpu.memory_space<vmem>>, %arg4: memref<128x128xf32, #tpu.memory_space<vmem>>, %arg5: memref<1x128xf32, #tpu.memory_space<vmem>>, %arg6: memref<1x2x128xf32, #tpu.memory_space<vmem>>) attributes {dimension_semantics = [#tpu.dimension_semantics<parallel>], iteration_bounds = array<i64: 2>, scalar_prefetch = 0 : i64, scratch_operands = 0 : i64, tpu.core_type = #tpu.core_type<tc>, window_params = [{transform_indices = @transform_0, window_bounds = array<i64: 512, 36>}, {pipeline_mode = #tpu.pipeline_mode<synchronous>, transform_indices = @transform_1, window_bounds = array<i64: 36, 128>}, {pipeline_mode = #tpu.pipeline_mode<synchronous>, transform_indices = @transform_2, window_bounds = array<i64: 1, 128>}, {pipeline_mode = #tpu.pipeline_mode<synchronous>, transform_indices = @transform_3, window_bounds = array<i64: 128, 128>}, {pipeline_mode = #tpu.pipeline_mode<synchronous>, transform_indices = @transform_4, window_bounds = array<i64: 1, 128>}, {transform_indices = @transform_5, window_bounds = array<i64: 1, 2, 128>}]} {
    %c0 = arith.constant 0 : index
    %c0_0 = arith.constant 0 : index
    %0 = vector.load %arg1[%c0, %c0_0] : memref<512x36xf32, #tpu.memory_space<vmem>>, vector<512x36xf32>
    %c0_1 = arith.constant 0 : index
    %c0_2 = arith.constant 0 : index
    %1 = vector.load %arg2[%c0_1, %c0_2] : memref<36x128xf32, #tpu.memory_space<vmem>>, vector<36x128xf32>
    %cst = arith.constant dense<0.000000e+00> : vector<512x128xf32>
    %2 = tpu.matmul %0, %1, %cst {dimension_numbers = #tpu.dot_dimension_numbers<[1], [0], [0], [1], [0, 0, 1, 1], [], []>} : vector<512x36xf32>, vector<36x128xf32>, vector<512x128xf32> -> vector<512x128xf32>
    %c0_3 = arith.constant 0 : index
    %c0_4 = arith.constant 0 : index
    %3 = vector.load %arg3[%c0_3, %c0_4] : memref<1x128xf32, #tpu.memory_space<vmem>>, vector<1x128xf32>
    %4 = vector.broadcast %3 : vector<1x128xf32> to vector<512x128xf32>
    %5 = arith.addf %2, %4 : vector<512x128xf32>
    %cst_5 = arith.constant 0.000000e+00 : f32
    %6 = vector.broadcast %cst_5 : f32 to vector<512x128xf32>
    %7 = arith.maximumf %5, %6 : vector<512x128xf32>
    %8 = vector.shape_cast %7 : vector<512x128xf32> to vector<2x256x128xf32>
    %cst_6 = arith.constant dense<0.000000e+00> : vector<2x128xf32>
    %9 = vector.multi_reduction <add>, %8, %cst_6 [1] : vector<2x256x128xf32> to vector<2x128xf32>
    %cst_7 = arith.constant 3.906250e-03 : f32
    %10 = vector.broadcast %cst_7 : f32 to vector<2x128xf32>
    %11 = arith.mulf %9, %10 : vector<2x128xf32>
    %c0_8 = arith.constant 0 : index
    %c0_9 = arith.constant 0 : index
    %12 = vector.load %arg4[%c0_8, %c0_9] : memref<128x128xf32, #tpu.memory_space<vmem>>, vector<128x128xf32>
    %cst_10 = arith.constant dense<0.000000e+00> : vector<2x128xf32>
    %13 = tpu.matmul %11, %12, %cst_10 {dimension_numbers = #tpu.dot_dimension_numbers<[1], [0], [0], [1], [0, 0, 1, 1], [], []>} : vector<2x128xf32>, vector<128x128xf32>, vector<2x128xf32> -> vector<2x128xf32>
    %c0_11 = arith.constant 0 : index
    %c0_12 = arith.constant 0 : index
    %14 = vector.load %arg5[%c0_11, %c0_12] : memref<1x128xf32, #tpu.memory_space<vmem>>, vector<1x128xf32>
    %15 = vector.broadcast %14 : vector<1x128xf32> to vector<2x128xf32>
    %16 = arith.addf %13, %15 : vector<2x128xf32>
    %c0_13 = arith.constant 0 : index
    %c0_14 = arith.constant 0 : index
    %c0_15 = arith.constant 0 : index
    %17 = vector.load %arg6[%c0_13, %c0_14, %c0_15] : memref<1x2x128xf32, #tpu.memory_space<vmem>>, vector<1x2x128xf32>
    %18 = vector.shape_cast %17 : vector<1x2x128xf32> to vector<2x128xf32>
    %19 = vector.shape_cast %16 : vector<2x128xf32> to vector<1x2x128xf32>
    tpu.vector_store %arg6[%c0_13, %c0_14, %c0_15], %19 {strides = array<i32>} : memref<1x2x128xf32, #tpu.memory_space<vmem>>, vector<1x2x128xf32>,
    return
  }
  func.func @transform_0(%arg0: i32) -> (i32, i32) {
    %c0_i32 = arith.constant 0 : i32
    %c0_i32_0 = arith.constant 0 : i32
    return %arg0, %c0_i32 : i32, i32
  }
  func.func @transform_1(%arg0: i32) -> (i32, i32) {
    %c0_i32 = arith.constant 0 : i32
    %c0_i32_0 = arith.constant 0 : i32
    %c0_i32_1 = arith.constant 0 : i32
    return %c0_i32, %c0_i32_0 : i32, i32
  }
  func.func @transform_2(%arg0: i32) -> (i32, i32) {
    %c0_i32 = arith.constant 0 : i32
    %c0_i32_0 = arith.constant 0 : i32
    %c0_i32_1 = arith.constant 0 : i32
    return %c0_i32, %c0_i32_0 : i32, i32
  }
  func.func @transform_3(%arg0: i32) -> (i32, i32) {
    %c0_i32 = arith.constant 0 : i32
    %c0_i32_0 = arith.constant 0 : i32
    %c0_i32_1 = arith.constant 0 : i32
    return %c0_i32, %c0_i32_0 : i32, i32
  }
  func.func @transform_4(%arg0: i32) -> (i32, i32) {
    %c0_i32 = arith.constant 0 : i32
    %c0_i32_0 = arith.constant 0 : i32
    %c0_i32_1 = arith.constant 0 : i32
    return %c0_i32, %c0_i32_0 : i32, i32
  }
  func.func @transform_5(%arg0: i32) -> (i32, i32, i32) {
    %c0_i32 = arith.constant 0 : i32
    %c0_i32_0 = arith.constant 0 : i32
    %c0_i32_1 = arith.constant 0 : i32
    return %arg0, %c0_i32, %c0_i32_0 : i32, i32, i32
  }
}

</mosaic_0001>

<llo_original>
// kernel: _lambda_.1
$region0: #{_lambda_.1}
  #allocation0 [shape = 'u32[]', space=smem, size = 0x4, offset = 0x4, fixed_abs, tag = 'smem constant byte address 0x4 - core index']
  #allocation1 [shape = 'u32[72,128]{1,0:T(1,128)}', space=vmem, size = 0x9000, scoped, tag = 'internal scratch']
  %s0 = inlined_call_operand.vmem [shape: f32[1024,36], index: 0, kind: input, shape index: {}]
  %s1 = inlined_call_operand.vmem [shape: f32[36,128], index: 1, kind: input, shape index: {}]
  %s2 = inlined_call_operand.vmem [shape: f32[1,128], index: 2, kind: input, shape index: {}]
  %s3 = inlined_call_operand.vmem [shape: f32[128,128], index: 3, kind: input, shape index: {}]
  %s4 = inlined_call_operand.vmem [shape: f32[1,128], index: 4, kind: input, shape index: {}]
  %s5 = inlined_call_operand.vmem [shape: f32[2,2,128], index: 5, kind: output, shape index: {}]
  %s6 = sld [smem:[#allocation0]]
  $region53: #{_lambda_.1} parent=0
    _
  %s8 = ssub.s32 1, %s6
  %s9 = scalar_select 0, %s8, %s6
  loop: start=0, step=1, limit=4
  $region2: #{_lambda_.1} parent=0 // loop_pre_header
    _
  $region3: #{_lambda_.1} parent=0 // loop_header
    %s11 = sphi 0, %s15
    %p12 = scmp.ge.s32.totalorder %s11, 4
    %s21 = sphi 0, %s23
    %s24 = sphi 0, %s21
    %s25 = sphi 0, %s24
    %s41 = sphi 0, %s25
    %s45 = sphi 0, %s45
    %s47 = sphi 0, %s45
    %s48 = sphi 0, %s47
    %s62 = sphi 0, %s48
    %s66 = sphi 0, %s66
    %s68 = sphi 0, %s66
    %s69 = sphi 0, %s68
    %s83 = sphi 0, %s69
    %s87 = sphi 0, %s87
    %s89 = sphi 0, %s87
    %s90 = sphi 0, %s89
    %s104 = sphi 0, %s90
    %s108 = sphi 0, %s108
    %s110 = sphi 0, %s108
    %s111 = sphi 0, %s110
    %s125 = sphi 0, %s111
    %s131 = sphi 0, %s133
    %s134 = sphi 0, %s131
    %s135 = sphi 0, %s134
    %s151 = sphi 0, %s135
  $region4: #{_lambda_.1} parent=0 // loop_header_branch
    %14 = sbr.rel (%p12) target = $region8
  $region5: #{_lambda_.1} parent=0 // loop_body
    %s16 = ssub.s32 %s11, 1
    %s17 = ssub.s32 %s11, 2
    %s18 = sadd.s32 %s11, 1
    %s19 = ssub.s32 %s11, %s18
    %p20 = scmp.eq.s32.totalorder %s19, 0
    %s22 = sadd.s32 %s21, 1
    %s23 = scalar_select %p20, %s21, %s22
    %p26 = pneg %p20
    %p27 = scmp.eq.s32.totalorder %s11, 1
    %p28 = por %p26, %p27
    %p29 = scmp.ne.s32.totalorder %s21, %s24
    %p30 = scmp.eq.s32.totalorder %s11, 0
    %p31 = por %p29, %p30
    %p32 = scmp.ne.s32.totalorder %s21, %s24
    %p33 = scmp.eq.s32.totalorder %s16, 1
    %p34 = por %p32, %p33
    %p35 = scmp.ne.s32.totalorder %s24, %s25
    %p36 = scmp.eq.s32.totalorder %s16, 0
    %p37 = por %p35, %p36
    %p38 = scmp.ne.s32.totalorder %s24, %s25
    %p39 = scmp.eq.s32.totalorder %s17, 1
    %p40 = por %p38, %p39
    %p42 = scmp.ne.s32.totalorder %s25, %s41
    %p43 = scmp.eq.s32.totalorder %s17, 0
    %p44 = por %p42, %p43
    %s46 = sadd.s32 %s45, 1
    %p49 = scmp.eq.s32.totalorder %s11, 1
    %p50 = scmp.ne.s32.totalorder %s45, %s47
    %p51 = scmp.eq.s32.totalorder %s11, 0
    %p52 = por %p50, %p51
    %p53 = scmp.ne.s32.totalorder %s45, %s47
    %p54 = scmp.eq.s32.totalorder %s16, 1
    %p55 = por %p53, %p54
    %p56 = scmp.ne.s32.totalorder %s47, %s48
    %p57 = scmp.eq.s32.totalorder %s16, 0
    %p58 = por %p56, %p57
    %p59 = scmp.ne.s32.totalorder %s47, %s48
    %p60 = scmp.eq.s32.totalorder %s17, 1
    %p61 = por %p59, %p60
    %p63 = scmp.ne.s32.totalorder %s48, %s62
    %p64 = scmp.eq.s32.totalorder %s17, 0
    %p65 = por %p63, %p64
    %s67 = sadd.s32 %s66, 1
    %p70 = scmp.eq.s32.totalorder %s11, 1
    %p71 = scmp.ne.s32.totalorder %s66, %s68
    %p72 = scmp.eq.s32.totalorder %s11, 0
    %p73 = por %p71, %p72
    %p74 = scmp.ne.s32.totalorder %s66, %s68
    %p75 = scmp.eq.s32.totalorder %s16, 1
    %p76 = por %p74, %p75
    %p77 = scmp.ne.s32.totalorder %s68, %s69
    %p78 = scmp.eq.s32.totalorder %s16, 0
    %p79 = por %p77, %p78
    %p80 = scmp.ne.s32.totalorder %s68, %s69
    %p81 = scmp.eq.s32.totalorder %s17, 1
    %p82 = por %p80, %p81
    %p84 = scmp.ne.s32.totalorder %s69, %s83
    %p85 = scmp.eq.s32.totalorder %s17, 0
    %p86 = por %p84, %p85
    %s88 = sadd.s32 %s87, 1
    %p91 = scmp.eq.s32.totalorder %s11, 1
    %p92 = scmp.ne.s32.totalorder %s87, %s89
    %p93 = scmp.eq.s32.totalorder %s11, 0
    %p94 = por %p92, %p93
    %p95 = scmp.ne.s32.totalorder %s87, %s89
    %p96 = scmp.eq.s32.totalorder %s16, 1
    %p97 = por %p95, %p96
    %p98 = scmp.ne.s32.totalorder %s89, %s90
    %p99 = scmp.eq.s32.totalorder %s16, 0
    %p100 = por %p98, %p99
    %p101 = scmp.ne.s32.totalorder %s89, %s90
    %p102 = scmp.eq.s32.totalorder %s17, 1
    %p103 = por %p101, %p102
    %p105 = scmp.ne.s32.totalorder %s90, %s104
    %p106 = scmp.eq.s32.totalorder %s17, 0
    %p107 = por %p105, %p106
    %s109 = sadd.s32 %s108, 1
    %p112 = scmp.eq.s32.totalorder %s11, 1
    %p113 = scmp.ne.s32.totalorder %s108, %s110
    %p114 = scmp.eq.s32.totalorder %s11, 0
    %p115 = por %p113, %p114
    %p116 = scmp.ne.s32.totalorder %s108, %s110
    %p117 = scmp.eq.s32.totalorder %s16, 1
    %p118 = por %p116, %p117
    %p119 = scmp.ne.s32.totalorder %s110, %s111
    %p120 = scmp.eq.s32.totalorder %s16, 0
    %p121 = por %p119, %p120
    %p122 = scmp.ne.s32.totalorder %s110, %s111
    %p123 = scmp.eq.s32.totalorder %s17, 1
    %p124 = por %p122, %p123
    %p126 = scmp.ne.s32.totalorder %s111, %s125
    %p127 = scmp.eq.s32.totalorder %s17, 0
    %p128 = por %p126, %p127
    %s129 = ssub.s32 %s11, %s18
    %p130 = scmp.eq.s32.totalorder %s129, 0
    %s132 = sadd.s32 %s131, 1
    %s133 = scalar_select %p130, %s131, %s132
    %p136 = pneg %p130
    %p137 = scmp.eq.s32.totalorder %s11, 1
    %p138 = por %p136, %p137
    %p139 = scmp.ne.s32.totalorder %s131, %s134
    %p140 = scmp.eq.s32.totalorder %s11, 0
    %p141 = por %p139, %p140
    %p142 = scmp.ne.s32.totalorder %s131, %s134
    %p143 = scmp.eq.s32.totalorder %s16, 1
    %p144 = por %p142, %p143
    %p145 = scmp.ne.s32.totalorder %s134, %s135
    %p146 = scmp.eq.s32.totalorder %s16, 0
    %p147 = por %p145, %p146
    %p148 = scmp.ne.s32.totalorder %s134, %s135
    %p149 = scmp.eq.s32.totalorder %s17, 1
    %p150 = por %p148, %p149
    %p152 = scmp.ne.s32.totalorder %s135, %s151
    %p153 = scmp.eq.s32.totalorder %s17, 0
    %p154 = por %p152, %p153
    %p155 = scmp.le.s32.totalorder 1, %s11
    %p156 = scmp.lt.s32.totalorder %s11, 3
    %p157 = pnand %p155, %p156
    %p158 = pneg %p157
    // Predicated region
    $region9: #{_lambda_.1} parent=5 // pred_check
      _
    $region10: #{_lambda_.1} parent=5 // pred_check_branch
      %160 = sbr.rel (%p157) target = $region12
    $region11: #{_lambda_.1} parent=5 // pred_region
      %s161 = ssub.s32 %s11, 1
      // Predicated region
      $region13: #{_lambda_.1} parent=11 // pred_check
        %p162 = pneg %p58
      $region14: #{_lambda_.1} parent=11 // pred_check_branch
        %164 = sbr.rel (%p162) target = $region16
      $region15: #{_lambda_.1} parent=11 // pred_region
        _
      $region16: #{_lambda_.1} parent=11 // pred_fallthru
        _
      // Predicated region
      $region17: #{_lambda_.1} parent=11 // pred_check
        %p165 = pneg %p79
      $region18: #{_lambda_.1} parent=11 // pred_check_branch
        %167 = sbr.rel (%p165) target = $region20
      $region19: #{_lambda_.1} parent=11 // pred_region
        _
      $region20: #{_lambda_.1} parent=11 // pred_fallthru
        _
      // Predicated region
      $region21: #{_lambda_.1} parent=11 // pred_check
        %p168 = pneg %p100
      $region22: #{_lambda_.1} parent=11 // pred_check_branch
        %170 = sbr.rel (%p168) target = $region24
      $region23: #{_lambda_.1} parent=11 // pred_region
        _
      $region24: #{_lambda_.1} parent=11 // pred_fallthru
        _
      // Predicated region
      $region25: #{_lambda_.1} parent=11 // pred_check
        %p171 = pneg %p121
      $region26: #{_lambda_.1} parent=11 // pred_check_branch
        %173 = sbr.rel (%p171) target = $region28
      $region27: #{_lambda_.1} parent=11 // pred_region
        _
      $region28: #{_lambda_.1} parent=11 // pred_fallthru
        _
    $region12: #{_lambda_.1} parent=5 // pred_fallthru
      _
    %p174 = scmp.lt.s32.totalorder %s11, 2
    // Predicated region
    $region29: #{_lambda_.1} parent=5 // pred_check
      %p175 = pneg %p174
    $region30: #{_lambda_.1} parent=5 // pred_check_branch
      %177 = sbr.rel (%p175) target = $region32
    $region31: #{_lambda_.1} parent=5 // pred_region
      // Predicated region
      $region33: #{_lambda_.1} parent=31 // pred_check
        %p178 = pneg %p31
      $region34: #{_lambda_.1} parent=31 // pred_check_branch
        %180 = sbr.rel (%p178) target = $region36
      $region35: #{_lambda_.1} parent=31 // pred_region
        %s181 = smul.u32 64, %s11
        %p182 = scmp.lt.s32.totalorder %s181, 127
        %s183 = scalar_select %p182, %s181, 127
        %s184 = smul.addr %s183, 8
        %s185 = scalar_lea.vmem %s0, %s184
        %s186 = smul.u32 64, %s11
      $region36: #{_lambda_.1} parent=31 // pred_fallthru
        _
    $region32: #{_lambda_.1} parent=5 // pred_fallthru
      _
    %p187 = scmp.le.s32.totalorder 1, %s11
    %p188 = scmp.lt.s32.totalorder %s11, 3
    %p189 = pnand %p187, %p188
    %p190 = pneg %p189
    // Predicated region
    $region37: #{_lambda_.1} parent=5 // pred_check
      _
    $region38: #{_lambda_.1} parent=5 // pred_check_branch
      %192 = sbr.rel (%p189) target = $region40
    $region39: #{_lambda_.1} parent=5 // pred_region
      %s193 = ssub.s32 %s11, 1
      %s194 = smul.u32 64, %s16
      %p195 = scmp.lt.s32.totalorder %s194, 127
      %s196 = scalar_select %p195, %s194, 127
      %s197 = smul.addr %s196, 8
      %s198 = scalar_lea.vmem %s0, %s197
      %p199 = pneg %p37
      %p200 = pneg %p34
      %p201 = pneg %p58
      %p202 = pneg %p55
      %p203 = pneg %p79
      %p204 = pneg %p76
      %p205 = pneg %p100
      %p206 = pneg %p97
      %p207 = pneg %p121
      %p208 = pneg %p118
      %p209 = pneg %p147
      %p210 = pneg %p144
      %p211 = scmp.lt.s32.totalorder %s16, 1
      %s212 = scalar_select %p211, %s16, 1
      %s213 = smul.addr %s212, 2
      %s214 = scalar_lea.vmem %s5, %s213
      %s215 = smul.u32 64, %s16
      %p216 = scmp.lt.s32.totalorder %s215, 127
      %s217 = scalar_select %p216, %s215, 127
      %s218 = smul.addr %s217, 8
      %s219 = scalar_lea.vmem %s0, %s218
      %s220 = smul.u32 64, %s16
      %p221 = scmp.lt.s32.totalorder %s16, 1
      %s222 = scalar_select %p221, %s16, 1
      %s223 = smul.addr %s222, 2
      %s224 = scalar_lea.vmem %s5, %s223
      %v225 = vld [vmem:[%s219] sm:$0xff]
      %v226 = vld [vmem:[%s219 + $0x8] sm:$0xff]
      %v227 = vld [vmem:[%s219 + $0x10] sm:$0xff]
      %v228 = vld [vmem:[%s219 + $0x18] sm:$0xff]
      %v229 = vld [vmem:[%s219 + $0x20] sm:$0xff]
      %v230 = vld [vmem:[%s219 + $0x28] sm:$0xff]
      %v231 = vld [vmem:[%s219 + $0x30] sm:$0xff]
      %v232 = vld [vmem:[%s219 + $0x38] sm:$0xff]
      %v233 = vld [vmem:[%s219 + $0x40] sm:$0xff]
      %v234 = vld [vmem:[%s219 + $0x48] sm:$0xff]
      %v235 = vld [vmem:[%s219 + $0x50] sm:$0xff]
      %v236 = vld [vmem:[%s219 + $0x58] sm:$0xff]
      %v237 = vld [vmem:[%s219 + $0x60] sm:$0xff]
      %v238 = vld [vmem:[%s219 + $0x68] sm:$0xff]
      %v239 = vld [vmem:[%s219 + $0x70] sm:$0xff]
      %v240 = vld [vmem:[%s219 + $0x78] sm:$0xff]
      %v241 = vld [vmem:[%s219 + $0x80] sm:$0xff]
      %v242 = vld [vmem:[%s219 + $0x88] sm:$0xff]
      %v243 = vld [vmem:[%s219 + $0x90] sm:$0xff]
      %v244 = vld [vmem:[%s219 + $0x98] sm:$0xff]
      %v245 = vld [vmem:[%s219 + $0xa0] sm:$0xff]
      %v246 = vld [vmem:[%s219 + $0xa8] sm:$0xff]
      %v247 = vld [vmem:[%s219 + $0xb0] sm:$0xff]
      %v248 = vld [vmem:[%s219 + $0xb8] sm:$0xff]
      %v249 = vld [vmem:[%s219 + $0xc0] sm:$0xff]
      %v250 = vld [vmem:[%s219 + $0xc8] sm:$0xff]
      %v251 = vld [vmem:[%s219 + $0xd0] sm:$0xff]
      %v252 = vld [vmem:[%s219 + $0xd8] sm:$0xff]
      %v253 = vld [vmem:[%s219 + $0xe0] sm:$0xff]
      %v254 = vld [vmem:[%s219 + $0xe8] sm:$0xff]
      %v255 = vld [vmem:[%s219 + $0xf0] sm:$0xff]
      %v256 = vld [vmem:[%s219 + $0xf8] sm:$0xff]
      %v257 = vld [vmem:[%s219 + $0x100] sm:$0xff]
      %v258 = vld [vmem:[%s219 + $0x108] sm:$0xff]
      %v259 = vld [vmem:[%s219 + $0x110] sm:$0xff]
      %v260 = vld [vmem:[%s219 + $0x118] sm:$0xff]
      %v261 = vld [vmem:[%s219 + $0x120] sm:$0xff]
      %v262 = vld [vmem:[%s219 + $0x128] sm:$0xff]
      %v263 = vld [vmem:[%s219 + $0x130] sm:$0xff]
      %v264 = vld [vmem:[%s219 + $0x138] sm:$0xff]
      %v265 = vld [vmem:[%s219 + $0x140] sm:$0xff]
      %v266 = vld [vmem:[%s219 + $0x148] sm:$0xff]
      %v267 = vld [vmem:[%s219 + $0x150] sm:$0xff]
      %v268 = vld [vmem:[%s219 + $0x158] sm:$0xff]
      %v269 = vld [vmem:[%s219 + $0x160] sm:$0xff]
      %v270 = vld [vmem:[%s219 + $0x168] sm:$0xff]
      %v271 = vld [vmem:[%s219 + $0x170] sm:$0xff]
      %v272 = vld [vmem:[%s219 + $0x178] sm:$0xff]
      %v273 = vld [vmem:[%s219 + $0x180] sm:$0xff]
      %v274 = vld [vmem:[%s219 + $0x188] sm:$0xff]
      %v275 = vld [vmem:[%s219 + $0x190] sm:$0xff]
      %v276 = vld [vmem:[%s219 + $0x198] sm:$0xff]
      %v277 = vld [vmem:[%s219 + $0x1a0] sm:$0xff]
      %v278 = vld [vmem:[%s219 + $0x1a8] sm:$0xff]
      %v279 = vld [vmem:[%s219 + $0x1b0] sm:$0xff]
      %v280 = vld [vmem:[%s219 + $0x1b8] sm:$0xff]
      %v281 = vld [vmem:[%s219 + $0x1c0] sm:$0xff]
      %v282 = vld [vmem:[%s219 + $0x1c8] sm:$0xff]
      %v283 = vld [vmem:[%s219 + $0x1d0] sm:$0xff]
      %v284 = vld [vmem:[%s219 + $0x1d8] sm:$0xff]
      %v285 = vld [vmem:[%s219 + $0x1e0] sm:$0xff]
      %v286 = vld [vmem:[%s219 + $0x1e8] sm:$0xff]
      %v287 = vld [vmem:[%s219 + $0x1f0] sm:$0xff]
      %v288 = vld [vmem:[%s219 + $0x1f8] sm:$0xff]
      %v289 = vld [vmem:[%s1] sm:$0xff]
      %v290 = vld [vmem:[%s1 + $0x8] sm:$0xff]
      %v291 = vld [vmem:[%s1 + $0x10] sm:$0xff]
      %v292 = vld [vmem:[%s1 + $0x18] sm:$0xff]
      %v293 = vld [vmem:[%s1 + $0x20] sm:$0xf]
      %v294 = vld [vmem:[%s2] sm:$0x1]
      %v296 = vperm.slane %v294, 0
      %vm298 = vcmask 293888
      %v300 = vsel %vm298, %v225, 0
      %v303 = vsel %vm298, %v226, 0
      %v306 = vsel %vm298, %v227, 0
      %v309 = vsel %vm298, %v228, 0
      %v312 = vsel %vm298, %v229, 0
      %v315 = vsel %vm298, %v230, 0
      %v318 = vsel %vm298, %v231, 0
      %v321 = vsel %vm298, %v232, 0
      %v324 = vsel %vm298, %v233, 0
      %v327 = vsel %vm298, %v234, 0
      %v330 = vsel %vm298, %v235, 0
      %v333 = vsel %vm298, %v236, 0
      %v336 = vsel %vm298, %v237, 0
      %v339 = vsel %vm298, %v238, 0
      %v342 = vsel %vm298, %v239, 0
      %v345 = vsel %vm298, %v240, 0
      %v348 = vsel %vm298, %v241, 0
      %v351 = vsel %vm298, %v242, 0
      %v354 = vsel %vm298, %v243, 0
      %v357 = vsel %vm298, %v244, 0
      %v360 = vsel %vm298, %v245, 0
      %v363 = vsel %vm298, %v246, 0
      %v366 = vsel %vm298, %v247, 0
      %v369 = vsel %vm298, %v248, 0
      %v372 = vsel %vm298, %v249, 0
      %v375 = vsel %vm298, %v250, 0
      %v378 = vsel %vm298, %v251, 0
      %v381 = vsel %vm298, %v252, 0
      %v384 = vsel %vm298, %v253, 0
      %v387 = vsel %vm298, %v254, 0
      %v390 = vsel %vm298, %v255, 0
      %v393 = vsel %vm298, %v256, 0
      %v396 = vsel %vm298, %v257, 0
      %v399 = vsel %vm298, %v258, 0
      %v402 = vsel %vm298, %v259, 0
      %v405 = vsel %vm298, %v260, 0
      %v408 = vsel %vm298, %v261, 0
      %v411 = vsel %vm298, %v262, 0
      %v414 = vsel %vm298, %v263, 0
      %v417 = vsel %vm298, %v264, 0
      %v420 = vsel %vm298, %v265, 0
      %v423 = vsel %vm298, %v266, 0
      %v426 = vsel %vm298, %v267, 0
      %v429 = vsel %vm298, %v268, 0
      %v432 = vsel %vm298, %v269, 0
      %v435 = vsel %vm298, %v270, 0
      %v438 = vsel %vm298, %v271, 0
      %v441 = vsel %vm298, %v272, 0
      %v444 = vsel %vm298, %v273, 0
      %v447 = vsel %vm298, %v274, 0
      %v450 = vsel %vm298, %v275, 0
      %v453 = vsel %vm298, %v276, 0
      %v456 = vsel %vm298, %v277, 0
      %v459 = vsel %vm298, %v278, 0
      %v462 = vsel %vm298, %v279, 0
      %v465 = vsel %vm298, %v280, 0
      %v468 = vsel %vm298, %v281, 0
      %v471 = vsel %vm298, %v282, 0
      %v474 = vsel %vm298, %v283, 0
      %v477 = vsel %vm298, %v284, 0
      %v480 = vsel %vm298, %v285, 0
      %v483 = vsel %vm298, %v286, 0
      %v486 = vsel %vm298, %v287, 0
      %v489 = vsel %vm298, %v288, 0
      %vm491 = vcmask 1043456
      %v493 = vsel %vm491, %v293, 0
      %495 = vmatpush.msra.mxu0 0.0
      %496 = vmatpush.msra.mxu0 0.0
      %497 = vmatpush.msra.mxu0 0.0
      %498 = vmatpush.msra.mxu0 0.0
      %499 = vmatpush.msra.mxu0 0.0
      %500 = vmatpush.msra.mxu0 0.0
      %501 = vmatpush.msra.mxu0 0.0
      %502 = vmatpush.msra.mxu0 0.0
      %503 = vmatpush.msra.mxu0 0.0
      %504 = vmatpush.msra.mxu0 0.0
      %505 = vmatpush.msra.mxu0 0.0
      %506 = vmatpush.msra.mxu0 %v493
      %507 = vmatpush.msra.mxu0 %v292
      %508 = vmatpush.msra.mxu0 %v291
      %509 = vmatpush.msra.mxu0 %v290
      %510 = vmatpush.msra.mxu0 %v289
      %511 = vmatmul.f32.gmra.mxu0 %v300
      %v512 = vpop.f32.mrf.mxu0
      %v513 = vadd.f32 %v296, %v512
      %514 = vmatmul.f32.gmra.mxu0 %v303
      %v515 = vpop.f32.mrf.mxu0
      %v516 = vadd.f32 %v296, %v515
      %517 = vmatmul.f32.gmra.mxu0 %v306
      %v518 = vpop.f32.mrf.mxu0
      %v519 = vadd.f32 %v296, %v518
      %520 = vmatmul.f32.gmra.mxu0 %v309
      %v521 = vpop.f32.mrf.mxu0
      %v522 = vadd.f32 %v296, %v521
      %523 = vmatmul.f32.gmra.mxu0 %v312
      %v524 = vpop.f32.mrf.mxu0
      %v525 = vadd.f32 %v296, %v524
      %526 = vmatmul.f32.gmra.mxu0 %v315
      %v527 = vpop.f32.mrf.mxu0
      %v528 = vadd.f32 %v296, %v527
      %529 = vmatmul.f32.gmra.mxu0 %v318
      %v530 = vpop.f32.mrf.mxu0
      %v531 = vadd.f32 %v296, %v530
      %532 = vmatmul.f32.gmra.mxu0 %v321
      %v533 = vpop.f32.mrf.mxu0
      %v534 = vadd.f32 %v296, %v533
      %535 = vmatmul.f32.gmra.mxu0 %v324
      %v536 = vpop.f32.mrf.mxu0
      %v537 = vadd.f32 %v296, %v536
      %538 = vmatmul.f32.gmra.mxu0 %v327
      %v539 = vpop.f32.mrf.mxu0
      %v540 = vadd.f32 %v296, %v539
      %541 = vmatmul.f32.gmra.mxu0 %v330
      %v542 = vpop.f32.mrf.mxu0
      %v543 = vadd.f32 %v296, %v542
      %544 = vmatmul.f32.gmra.mxu0 %v333
      %v545 = vpop.f32.mrf.mxu0
      %v546 = vadd.f32 %v296, %v545
      %547 = vmatmul.f32.gmra.mxu0 %v336
      %v548 = vpop.f32.mrf.mxu0
      %v549 = vadd.f32 %v296, %v548
      %550 = vmatmul.f32.gmra.mxu0 %v339
      %v551 = vpop.f32.mrf.mxu0
      %v552 = vadd.f32 %v296, %v551
      %553 = vmatmul.f32.gmra.mxu0 %v342
      %v554 = vpop.f32.mrf.mxu0
      %v555 = vadd.f32 %v296, %v554
      %556 = vmatmul.f32.gmra.mxu0 %v345
      %v557 = vpop.f32.mrf.mxu0
      %v558 = vadd.f32 %v296, %v557
      %559 = vmatmul.f32.gmra.mxu0 %v348
      %v560 = vpop.f32.mrf.mxu0
      %v561 = vadd.f32 %v296, %v560
      %562 = vmatmul.f32.gmra.mxu0 %v351
      %v563 = vpop.f32.mrf.mxu0
      %v564 = vadd.f32 %v296, %v563
      %565 = vmatmul.f32.gmra.mxu0 %v354
      %v566 = vpop.f32.mrf.mxu0
      %v567 = vadd.f32 %v296, %v566
      %568 = vmatmul.f32.gmra.mxu0 %v357
      %v569 = vpop.f32.mrf.mxu0
      %v570 = vadd.f32 %v296, %v569
      %571 = vmatmul.f32.gmra.mxu0 %v360
      %v572 = vpop.f32.mrf.mxu0
      %v573 = vadd.f32 %v296, %v572
      %574 = vmatmul.f32.gmra.mxu0 %v363
      %v575 = vpop.f32.mrf.mxu0
      %v576 = vadd.f32 %v296, %v575
      %577 = vmatmul.f32.gmra.mxu0 %v366
      %v578 = vpop.f32.mrf.mxu0
      %v579 = vadd.f32 %v296, %v578
      %580 = vmatmul.f32.gmra.mxu0 %v369
      %v581 = vpop.f32.mrf.mxu0
      %v582 = vadd.f32 %v296, %v581
      %583 = vmatmul.f32.gmra.mxu0 %v372
      %v584 = vpop.f32.mrf.mxu0
      %v585 = vadd.f32 %v296, %v584
      %586 = vmatmul.f32.gmra.mxu0 %v375
      %v587 = vpop.f32.mrf.mxu0
      %v588 = vadd.f32 %v296, %v587
      %589 = vmatmul.f32.gmra.mxu0 %v378
      %v590 = vpop.f32.mrf.mxu0
      %v591 = vadd.f32 %v296, %v590
      %592 = vmatmul.f32.gmra.mxu0 %v381
      %v593 = vpop.f32.mrf.mxu0
      %v594 = vadd.f32 %v296, %v593
      %595 = vmatmul.f32.gmra.mxu0 %v384
      %v596 = vpop.f32.mrf.mxu0
      %v597 = vadd.f32 %v296, %v596
      %598 = vmatmul.f32.gmra.mxu0 %v387
      %v599 = vpop.f32.mrf.mxu0
      %v600 = vadd.f32 %v296, %v599
      %601 = vmatmul.f32.gmra.mxu0 %v390
      %v602 = vpop.f32.mrf.mxu0
      %v603 = vadd.f32 %v296, %v602
      %604 = vmatmul.f32.gmra.mxu0 %v393
      %v605 = vpop.f32.mrf.mxu0
      %v606 = vadd.f32 %v296, %v605
      %607 = vmatmul.f32.gmra.mxu0 %v396
      %v608 = vpop.f32.mrf.mxu0
      %v609 = vadd.f32 %v296, %v608
      %610 = vmatmul.f32.gmra.mxu0 %v399
      %v611 = vpop.f32.mrf.mxu0
      %v612 = vadd.f32 %v296, %v611
      %613 = vmatmul.f32.gmra.mxu0 %v402
      %v614 = vpop.f32.mrf.mxu0
      %v615 = vadd.f32 %v296, %v614
      %616 = vmatmul.f32.gmra.mxu0 %v405
      %v617 = vpop.f32.mrf.mxu0
      %v618 = vadd.f32 %v296, %v617
      %619 = vmatmul.f32.gmra.mxu0 %v408
      %v620 = vpop.f32.mrf.mxu0
      %v621 = vadd.f32 %v296, %v620
      %622 = vmatmul.f32.gmra.mxu0 %v411
      %v623 = vpop.f32.mrf.mxu0
      %v624 = vadd.f32 %v296, %v623
      %625 = vmatmul.f32.gmra.mxu0 %v414
      %v626 = vpop.f32.mrf.mxu0
      %v627 = vadd.f32 %v296, %v626
      %628 = vmatmul.f32.gmra.mxu0 %v417
      %v629 = vpop.f32.mrf.mxu0
      %v630 = vadd.f32 %v296, %v629
      %631 = vmatmul.f32.gmra.mxu0 %v420
      %v632 = vpop.f32.mrf.mxu0
      %v633 = vadd.f32 %v296, %v632
      %634 = vmatmul.f32.gmra.mxu0 %v423
      %v635 = vpop.f32.mrf.mxu0
      %v636 = vadd.f32 %v296, %v635
      %637 = vmatmul.f32.gmra.mxu0 %v426
      %v638 = vpop.f32.mrf.mxu0
      %v639 = vadd.f32 %v296, %v638
      %640 = vmatmul.f32.gmra.mxu0 %v429
      %v641 = vpop.f32.mrf.mxu0
      %v642 = vadd.f32 %v296, %v641
      %643 = vmatmul.f32.gmra.mxu0 %v432
      %v644 = vpop.f32.mrf.mxu0
      %v645 = vadd.f32 %v296, %v644
      %646 = vmatmul.f32.gmra.mxu0 %v435
      %v647 = vpop.f32.mrf.mxu0
      %v648 = vadd.f32 %v296, %v647
      %649 = vmatmul.f32.gmra.mxu0 %v438
      %v650 = vpop.f32.mrf.mxu0
      %v651 = vadd.f32 %v296, %v650
      %652 = vmatmul.f32.gmra.mxu0 %v441
      %v653 = vpop.f32.mrf.mxu0
      %v654 = vadd.f32 %v296, %v653
      %655 = vmatmul.f32.gmra.mxu0 %v444
      %v656 = vpop.f32.mrf.mxu0
      %v657 = vadd.f32 %v296, %v656
      %658 = vmatmul.f32.gmra.mxu0 %v447
      %v659 = vpop.f32.mrf.mxu0
      %v660 = vadd.f32 %v296, %v659
      %661 = vmatmul.f32.gmra.mxu0 %v450
      %v662 = vpop.f32.mrf.mxu0
      %v663 = vadd.f32 %v296, %v662
      %664 = vmatmul.f32.gmra.mxu0 %v453
      %v665 = vpop.f32.mrf.mxu0
      %v666 = vadd.f32 %v296, %v665
      %667 = vmatmul.f32.gmra.mxu0 %v456
      %v668 = vpop.f32.mrf.mxu0
      %v669 = vadd.f32 %v296, %v668
      %670 = vmatmul.f32.gmra.mxu0 %v459
      %v671 = vpop.f32.mrf.mxu0
      %v672 = vadd.f32 %v296, %v671
      %673 = vmatmul.f32.gmra.mxu0 %v462
      %v674 = vpop.f32.mrf.mxu0
      %v675 = vadd.f32 %v296, %v674
      %676 = vmatmul.f32.gmra.mxu0 %v465
      %v677 = vpop.f32.mrf.mxu0
      %v678 = vadd.f32 %v296, %v677
      %679 = vmatmul.f32.gmra.mxu0 %v468
      %v680 = vpop.f32.mrf.mxu0
      %v681 = vadd.f32 %v296, %v680
      %682 = vmatmul.f32.gmra.mxu0 %v471
      %v683 = vpop.f32.mrf.mxu0
      %v684 = vadd.f32 %v296, %v683
      %685 = vmatmul.f32.gmra.mxu0 %v474
      %v686 = vpop.f32.mrf.mxu0
      %v687 = vadd.f32 %v296, %v686
      %688 = vmatmul.f32.gmra.mxu0 %v477
      %v689 = vpop.f32.mrf.mxu0
      %v690 = vadd.f32 %v296, %v689
      %691 = vmatmul.f32.gmra.mxu0 %v480
      %v692 = vpop.f32.mrf.mxu0
      %v693 = vadd.f32 %v296, %v692
      %694 = vmatmul.f32.gmra.mxu0 %v483
      %v695 = vpop.f32.mrf.mxu0
      %v696 = vadd.f32 %v296, %v695
      %697 = vmatmul.f32.gmra.mxu0 %v486
      %v698 = vpop.f32.mrf.mxu0
      %v699 = vadd.f32 %v296, %v698
      %700 = vmatmul.f32.gmra.mxu0 %v489
      %v701 = vpop.f32.mrf.mxu0
      %v702 = vadd.f32 %v296, %v701
      %703 = vdwg.mxu0
      %v704 = vmax.f32 %v513, 0.0
      %v705 = vmax.f32 %v516, 0.0
      %v706 = vmax.f32 %v519, 0.0
      %v707 = vmax.f32 %v522, 0.0
      %v708 = vmax.f32 %v525, 0.0
      %v709 = vmax.f32 %v528, 0.0
      %v710 = vmax.f32 %v531, 0.0
      %v711 = vmax.f32 %v534, 0.0
      %v712 = vmax.f32 %v537, 0.0
      %v713 = vmax.f32 %v540, 0.0
      %v714 = vmax.f32 %v543, 0.0
      %v715 = vmax.f32 %v546, 0.0
      %v716 = vmax.f32 %v549, 0.0
      %v717 = vmax.f32 %v552, 0.0
      %v718 = vmax.f32 %v555, 0.0
      %v719 = vmax.f32 %v558, 0.0
      %v720 = vmax.f32 %v561, 0.0
      %v721 = vmax.f32 %v564, 0.0
      %v722 = vmax.f32 %v567, 0.0
      %v723 = vmax.f32 %v570, 0.0
      %v724 = vmax.f32 %v573, 0.0
      %v725 = vmax.f32 %v576, 0.0
      %v726 = vmax.f32 %v579, 0.0
      %v727 = vmax.f32 %v582, 0.0
      %v728 = vmax.f32 %v585, 0.0
      %v729 = vmax.f32 %v588, 0.0
      %v730 = vmax.f32 %v591, 0.0
      %v731 = vmax.f32 %v594, 0.0
      %v732 = vmax.f32 %v597, 0.0
      %v733 = vmax.f32 %v600, 0.0
      %v734 = vmax.f32 %v603, 0.0
      %v735 = vmax.f32 %v606, 0.0
      %v736 = vmax.f32 %v609, 0.0
      %v737 = vmax.f32 %v612, 0.0
      %v738 = vmax.f32 %v615, 0.0
      %v739 = vmax.f32 %v618, 0.0
      %v740 = vmax.f32 %v621, 0.0
      %v741 = vmax.f32 %v624, 0.0
      %v742 = vmax.f32 %v627, 0.0
      %v743 = vmax.f32 %v630, 0.0
      %v744 = vmax.f32 %v633, 0.0
      %v745 = vmax.f32 %v636, 0.0
      %v746 = vmax.f32 %v639, 0.0
      %v747 = vmax.f32 %v642, 0.0
      %v748 = vmax.f32 %v645, 0.0
      %v749 = vmax.f32 %v648, 0.0
      %v750 = vmax.f32 %v651, 0.0
      %v751 = vmax.f32 %v654, 0.0
      %v752 = vmax.f32 %v657, 0.0
      %v753 = vmax.f32 %v660, 0.0
      %v754 = vmax.f32 %v663, 0.0
      %v755 = vmax.f32 %v666, 0.0
      %v756 = vmax.f32 %v669, 0.0
      %v757 = vmax.f32 %v672, 0.0
      %v758 = vmax.f32 %v675, 0.0
      %v759 = vmax.f32 %v678, 0.0
      %v760 = vmax.f32 %v681, 0.0
      %v761 = vmax.f32 %v684, 0.0
      %v762 = vmax.f32 %v687, 0.0
      %v763 = vmax.f32 %v690, 0.0
      %v764 = vmax.f32 %v693, 0.0
      %v765 = vmax.f32 %v696, 0.0
      %v766 = vmax.f32 %v699, 0.0
      %v767 = vmax.f32 %v702, 0.0
      %v768 = vadd.f32 %v704, %v705
      %v769 = vadd.f32 %v768, %v706
      %v770 = vadd.f32 %v769, %v707
      %v771 = vadd.f32 %v770, %v708
      %v772 = vadd.f32 %v771, %v709
      %v773 = vadd.f32 %v772, %v710
      %v774 = vadd.f32 %v773, %v711
      %v775 = vadd.f32 %v774, %v712
      %v776 = vadd.f32 %v775, %v713
      %v777 = vadd.f32 %v776, %v714
      %v778 = vadd.f32 %v777, %v715
      %v779 = vadd.f32 %v778, %v716
      %v780 = vadd.f32 %v779, %v717
      %v781 = vadd.f32 %v780, %v718
      %v782 = vadd.f32 %v781, %v719
      %v783 = vadd.f32 %v782, %v720
      %v784 = vadd.f32 %v783, %v721
      %v785 = vadd.f32 %v784, %v722
      %v786 = vadd.f32 %v785, %v723
      %v787 = vadd.f32 %v786, %v724
      %v788 = vadd.f32 %v787, %v725
      %v789 = vadd.f32 %v788, %v726
      %v790 = vadd.f32 %v789, %v727
      %v791 = vadd.f32 %v790, %v728
      %v792 = vadd.f32 %v791, %v729
      %v793 = vadd.f32 %v792, %v730
      %v794 = vadd.f32 %v793, %v731
      %v795 = vadd.f32 %v794, %v732
      %v796 = vadd.f32 %v795, %v733
      %v797 = vadd.f32 %v796, %v734
      %v798 = vadd.f32 %v797, %v735
      %v799 = vrot.slane %v798, 4
      %v800 = vadd.f32 %v798, %v799
      %v801 = vrot.slane %v800, 2
      %v802 = vadd.f32 %v800, %v801
      %v803 = vrot.slane %v802, 1
      %v804 = vadd.f32 %v802, %v803
      %v805 = vadd.f32 %v736, %v737
      %v806 = vadd.f32 %v805, %v738
      %v807 = vadd.f32 %v806, %v739
      %v808 = vadd.f32 %v807, %v740
      %v809 = vadd.f32 %v808, %v741
      %v810 = vadd.f32 %v809, %v742
      %v811 = vadd.f32 %v810, %v743
      %v812 = vadd.f32 %v811, %v744
      %v813 = vadd.f32 %v812, %v745
      %v814 = vadd.f32 %v813, %v746
      %v815 = vadd.f32 %v814, %v747
      %v816 = vadd.f32 %v815, %v748
      %v817 = vadd.f32 %v816, %v749
      %v818 = vadd.f32 %v817, %v750
      %v819 = vadd.f32 %v818, %v751
      %v820 = vadd.f32 %v819, %v752
      %v821 = vadd.f32 %v820, %v753
      %v822 = vadd.f32 %v821, %v754
      %v823 = vadd.f32 %v822, %v755
      %v824 = vadd.f32 %v823, %v756
      %v825 = vadd.f32 %v824, %v757
      %v826 = vadd.f32 %v825, %v758
      %v827 = vadd.f32 %v826, %v759
      %v828 = vadd.f32 %v827, %v760
      %v829 = vadd.f32 %v828, %v761
      %v830 = vadd.f32 %v829, %v762
      %v831 = vadd.f32 %v830, %v763
      %v832 = vadd.f32 %v831, %v764
      %v833 = vadd.f32 %v832, %v765
      %v834 = vadd.f32 %v833, %v766
      %v835 = vadd.f32 %v834, %v767
      %v836 = vrot.slane %v835, 4
      %v837 = vadd.f32 %v835, %v836
      %v838 = vrot.slane %v837, 2
      %v839 = vadd.f32 %v837, %v838
      %v840 = vrot.slane %v839, 1
      %v841 = vadd.f32 %v839, %v840
      %v842 = vmul.f32 %v804, 0.00390625
      %v843 = vmul.f32 %v841, 0.00390625
      %v844 = vld [vmem:[%s3] sm:$0xff]
      %v845 = vld [vmem:[%s3 + $0x8] sm:$0xff]
      %v846 = vld [vmem:[%s3 + $0x10] sm:$0xff]
      %v847 = vld [vmem:[%s3 + $0x18] sm:$0xff]
      %v848 = vld [vmem:[%s3 + $0x20] sm:$0xff]
      %v849 = vld [vmem:[%s3 + $0x28] sm:$0xff]
      %v850 = vld [vmem:[%s3 + $0x30] sm:$0xff]
      %v851 = vld [vmem:[%s3 + $0x38] sm:$0xff]
      %v852 = vld [vmem:[%s3 + $0x40] sm:$0xff]
      %v853 = vld [vmem:[%s3 + $0x48] sm:$0xff]
      %v854 = vld [vmem:[%s3 + $0x50] sm:$0xff]
      %v855 = vld [vmem:[%s3 + $0x58] sm:$0xff]
      %v856 = vld [vmem:[%s3 + $0x60] sm:$0xff]
      %v857 = vld [vmem:[%s3 + $0x68] sm:$0xff]
      %v858 = vld [vmem:[%s3 + $0x70] sm:$0xff]
      %v859 = vld [vmem:[%s3 + $0x78] sm:$0xff]
      %v860 = vld [vmem:[%s4] sm:$0x1]
      %v862 = vperm.slane %v860, 0
      %vm866 = vcmask 1041409
      %v867 = vsel %vm866, %v843, %v842
      %869 = vmatpush.msra.mxu0 %v859
      %870 = vmatpush.msra.mxu0 %v858
      %871 = vmatpush.msra.mxu0 %v857
      %872 = vmatpush.msra.mxu0 %v856
      %873 = vmatpush.msra.mxu0 %v855
      %874 = vmatpush.msra.mxu0 %v854
      %875 = vmatpush.msra.mxu0 %v853
      %876 = vmatpush.msra.mxu0 %v852
      %877 = vmatpush.msra.mxu0 %v851
      %878 = vmatpush.msra.mxu0 %v850
      %879 = vmatpush.msra.mxu0 %v849
      %880 = vmatpush.msra.mxu0 %v848
      %881 = vmatpush.msra.mxu0 %v847
      %882 = vmatpush.msra.mxu0 %v846
      %883 = vmatpush.msra.mxu0 %v845
      %884 = vmatpush.msra.mxu0 %v844
      %885 = vmatmul.f32.gmra.mxu0 %v867
      %v886 = vpop.f32.mrf.mxu0
      %v887 = vadd.f32 %v862, %v886
      %888 = vdwg.mxu0
      %889 = vst [vmem:[%s224] sm:$0x3] %v887
      %p890 = scmp.lt.s32.totalorder %s16, 1
      %s891 = scalar_select %p890, %s16, 1
      %s892 = smul.addr %s891, 2
      %s893 = scalar_lea.vmem %s5, %s892
      // Predicated region
      $region41: #{_lambda_.1} parent=39 // pred_check
        %p894 = pneg %p144
      $region42: #{_lambda_.1} parent=39 // pred_check_branch
        %896 = sbr.rel (%p894) target = $region44
      $region43: #{_lambda_.1} parent=39 // pred_region
        _
      $region44: #{_lambda_.1} parent=39 // pred_fallthru
        _
    $region40: #{_lambda_.1} parent=5 // pred_fallthru
      _
    %p897 = scmp.le.s32.totalorder 2, %s11
    // Predicated region
    $region45: #{_lambda_.1} parent=5 // pred_check
      %p898 = pneg %p897
    $region46: #{_lambda_.1} parent=5 // pred_check_branch
      %900 = sbr.rel (%p898) target = $region48
    $region47: #{_lambda_.1} parent=5 // pred_region
      %s901 = ssub.s32 %s11, 2
      // Predicated region
      $region49: #{_lambda_.1} parent=47 // pred_check
        %p902 = pneg %p150
      $region50: #{_lambda_.1} parent=47 // pred_check_branch
        %904 = sbr.rel (%p902) target = $region52
      $region51: #{_lambda_.1} parent=47 // pred_region
        %p905 = scmp.lt.s32.totalorder %s17, 1
        %s906 = scalar_select %p905, %s17, 1
        %s907 = smul.addr %s906, 2
        %s908 = scalar_lea.vmem %s5, %s907
      $region52: #{_lambda_.1} parent=47 // pred_fallthru
        _
    $region48: #{_lambda_.1} parent=5 // pred_fallthru
      _
  $region6: #{_lambda_.1} parent=0 // loop_footer
    %s15 = sadd.s32 1, %s11
  $region7: #{_lambda_.1} parent=0 // loop_footer_branch
    %10 = sbr.rel target = $region3
  $region8: #{_lambda_.1} parent=0 // loop_exit
    _

</llo_original>
